<compile_context>
chip_gen: v7x
topology: tpu7x:2x2x1
jax: 0.10.0
libtpu: 0.0.40
codegen_flags: <defaults>
</compile_context>

<pallas_src>
import jax
import jax.numpy as jnp
from jax.experimental import pallas as pl
from jax.experimental.pallas import tpu as pltpu


# --------------------------------------------------------------------------- #
# helpers
# --------------------------------------------------------------------------- #
def _round_up(x, m):
    return ((x + m - 1) // m) * m


def _cdiv(a, b):
    return (a + b - 1) // b


def _vmem_budget_bytes():
    """Per-TensorCore VMEM budget: physical minus headroom, capped to the
    review-recommended ranges (48 MiB v7x, 96 MiB v5e/v6e)."""
    phys = None
    try:
        info = pltpu.get_tpu_info()
        phys = getattr(info, "vmem_capacity_bytes", None)
    except Exception:
        phys = None
    if not phys:
        phys = 64 * 1024 * 1024                     # conservative (v7x per-TC)
    budget = min(int(phys) - 16 * 1024 * 1024, 96 * 1024 * 1024)
    return max(32 * 1024 * 1024, budget)


def _vmem_estimate(tm, k_pad, h_pad, n_pad, tk, n_k, bufs=2, itemsize=2):
    """Rough VMEM working-set estimate (bytes) for a tile plan."""
    if n_k == 1:  # resident W1, no accumulator
        est = (2 * tm * k_pad * itemsize            # x tile (double buffered)
               + 2 * k_pad * h_pad * itemsize       # W1 (conservatively x2)
               + 2 * h_pad * n_pad * itemsize       # fused head weights
               + 2 * tm * n_pad * 4                 # f32 output tile
               + tm * h_pad * (4 + itemsize)        # h in f32 + bf16 recast
               + 2 * (h_pad + n_pad) * 4)           # biases
    else:         # streamed K
        est = (bufs * tm * tk * itemsize            # x slices
               + bufs * tk * h_pad * itemsize       # W1 slices
               + 2 * h_pad * n_pad * itemsize       # fused head weights
               + 2 * tm * n_pad * 4                 # f32 output tile
               + tm * h_pad * 4                     # f32 accumulator scratch
               + tm * h_pad * (4 + itemsize)        # epilogue temporaries
               + 2 * (h_pad + n_pad) * 4)           # biases
    return int(est * 1.15)


# --------------------------------------------------------------------------- #
# kernels
# --------------------------------------------------------------------------- #
def enc_kernel_resident(x_ref, w1_ref, b1_ref, wcat_ref, bcat_ref, out_ref):
    """Grid = (batch_tiles,) — whole W1 VMEM-resident, no accumulator."""
    h = jnp.dot(x_ref[...], w1_ref[...], preferred_element_type=jnp.float32)
    h = jnp.maximum(h + b1_ref[...], 0.0)
    out = jnp.dot(h.astype(wcat_ref.dtype), wcat_ref[...],
                  preferred_element_type=jnp.float32)
    out_ref[...] = (out + bcat_ref[...]).astype(out_ref.dtype)


def enc_kernel_stream(x_ref, w1_ref, b1_ref, wcat_ref, bcat_ref, out_ref,
                      acc_ref):
    """Grid = (batch_tiles [parallel], k_tiles [arbitrary, reduction])."""
    k = pl.program_id(1)
    partial = jnp.dot(x_ref[...], w1_ref[...],
                      preferred_element_type=jnp.float32)

    @pl.when(k == 0)
    def _():                      # first K step: assign (no zero-fill store)
        acc_ref[...] = partial

    @pl.when(k != 0)
    def _():
        acc_ref[...] += partial

    @pl.when(k == pl.num_programs(1) - 1)
    def _():
        h = jnp.maximum(acc_ref[...] + b1_ref[...], 0.0)
        out = jnp.dot(h.astype(wcat_ref.dtype), wcat_ref[...],
                      preferred_element_type=jnp.float32)
        out_ref[...] = (out + bcat_ref[...]).astype(out_ref.dtype)


# --------------------------------------------------------------------------- #
# one-time parameter preprocessing (hoisted out of the per-call path)
# --------------------------------------------------------------------------- #
def enc_prepare_params(w1, b1, wmu, bmu, wls, bls, *, tk_max=512,
                       compute_dtype=jnp.bfloat16, _force_stream=False):
    """Fuse fc_mu/fc_logstd into one [hidden, 2*latent] head, pad all feature
    dims to multiples of 128, cast matmul operands to the MXU dtype, and pick
    the K tiling (resident vs streamed W1) from a VMEM budget.
    Call once; reuse the returned dict for every enc_forward call."""
    in_dim, hidden = w1.shape
    latent = wmu.shape[1]
    b1 = jnp.asarray(b1).reshape(1, -1)
    bmu = jnp.asarray(bmu).reshape(1, -1)
    bls = jnp.asarray(bls).reshape(1, -1)

    h_pad = _round_up(hidden, 128)
    n_pad = _round_up(2 * latent, 128)
    k128 = _round_up(in_dim, 128)
    budget = _vmem_budget_bytes()

    # Resident W1 whenever the plan fits VMEM (checked at a small reference
    # tm=128 — forward can only shrink tm further); otherwise stream K with
    # balanced tiles (no tk=128 cliff).
    resident_fits = _vmem_estimate(128, k128, h_pad, n_pad, k128, 1) <= budget
    if resident_fits and not _force_stream:
        n_k, tk, k_pad = 1, k128, k128
    else:
        n_k = max(2, _cdiv(k128, tk_max))
        tk = _round_up(_cdiv(k128, n_k), 128)
        k_pad = n_k * tk

    def pad2(a, r, c):
        return jnp.pad(a, ((0, r - a.shape[0]), (0, c - a.shape[1])))

    wcat = jnp.concatenate([wmu, wls], axis=1)      # [hidden, 2*latent]
    bcat = jnp.concatenate([bmu, bls], axis=1)      # [1, 2*latent]

    return dict(
        in_dim=in_dim, hidden=hidden, latent=latent,
        k_pad=k_pad, h_pad=h_pad, n_pad=n_pad, tk=tk, n_k=n_k,
        budget=budget, compute_dtype=compute_dtype,
        w1=pad2(w1, k_pad, h_pad).astype(compute_dtype),
        b1=pad2(b1, 1, h_pad).astype(jnp.float32),       # f32 epilogue
        wcat=pad2(wcat, h_pad, n_pad).astype(compute_dtype),
        bcat=pad2(bcat, 1, n_pad).astype(jnp.float32),   # f32 epilogue
    )


# --------------------------------------------------------------------------- #
# forward
# --------------------------------------------------------------------------- #
def enc_forward(x, params, *, tm_max=512, min_batch_tiles=2):
    """ENC forward. `params` comes from enc_prepare_params (call once).
    min_batch_tiles=2 keeps both v7x TensorCores busy for batch>=16; set it to
    1 on single-TC chips (v5e/v6e) when W1 is streamed and memory-bound."""
    batch, in_dim = x.shape
    assert in_dim == params["in_dim"], "input feature dim mismatch"

    k_pad, h_pad, n_pad = params["k_pad"], params["h_pad"], params["n_pad"]
    tk, n_k, budget = params["tk"], params["n_k"], params["budget"]
    latent, cdt = params["latent"], params["compute_dtype"]

    # --- balanced batch tiling (no b_pad overshoot), >=2 tiles when big -----
    want_tiles = max(_cdiv(batch, tm_max),
                     min_batch_tiles if batch >= 16 else 1)
    tm = _round_up(_cdiv(batch, want_tiles), 8)

    # optional 3-deep buffering for the streamed path (helps v5e) if it fits
    bufs = 3 if (n_k >= 3 and
                 _vmem_estimate(tm, k_pad, h_pad, n_pad, tk, n_k, 3) <= budget
                 ) else 2
    # shrink tm until the plan fits the VMEM budget (v7x: 64 MiB per TC)
    while tm > 8 and _vmem_estimate(tm, k_pad, h_pad, n_pad, tk, n_k,
                                    bufs) > budget:
        tm = max(8, _round_up(tm // 2, 8))

    n_bt = _cdiv(batch, tm)
    b_pad = n_bt * tm

    # --- per-call input prep (only x) ---------------------------------------
    if (b_pad, k_pad) != (batch, in_dim):
        x = jnp.pad(x, ((0, b_pad - batch), (0, k_pad - in_dim)))
    x = x.astype(cdt)

    # --- specs / grid --------------------------------------------------------
    if n_k == 1:
        kernel = enc_kernel_resident
        grid = (n_bt,)
        in_specs = [
            pl.BlockSpec((tm, k_pad), lambda i: (i, 0)),        # x tile
            pl.BlockSpec((k_pad, h_pad), lambda i: (0, 0)),     # W1 (resident)
            pl.BlockSpec((1, h_pad), lambda i: (0, 0)),         # b1
            pl.BlockSpec((h_pad, n_pad), lambda i: (0, 0)),     # Wcat
            pl.BlockSpec((1, n_pad), lambda i: (0, 0)),         # bcat
        ]
        out_spec = pl.BlockSpec((tm, n_pad), lambda i: (i, 0))
        scratch = []
        dims = ("parallel",)
    else:
        kernel = enc_kernel_stream
        grid = (n_bt, n_k)

        def _stream_spec(shape, imap):
            if bufs > 2:
                try:
                    return pl.BlockSpec(shape, imap,
                                        pipeline_mode=pl.Buffered(bufs))
                except TypeError:      # older BlockSpec without pipeline_mode
                    pass
            return pl.BlockSpec(shape, imap)

        in_specs = [
            _stream_spec((tm, tk), lambda i, k: (i, k)),        # x slice
            _stream_spec((tk, h_pad), lambda i, k: (k, 0)),     # W1 slice
            pl.BlockSpec((1, h_pad), lambda i, k: (0, 0)),      # b1
            pl.BlockSpec((h_pad, n_pad), lambda i, k: (0, 0)),  # Wcat (resident)
            pl.BlockSpec((1, n_pad), lambda i, k: (0, 0)),      # bcat
        ]
        out_spec = pl.BlockSpec((tm, n_pad), lambda i, k: (i, 0))
        scratch = [pltpu.VMEM((tm, h_pad), jnp.float32)]
        dims = ("parallel", "arbitrary")

    # --- truthful cost estimate ----------------------------------------------
    flops = 2 * b_pad * k_pad * h_pad + 2 * b_pad * h_pad * n_pad
    w1_bytes = k_pad * h_pad * 2
    w1_traffic = w1_bytes * (n_bt if n_k > 1 else 1)   # re-fetched per batch tile
    bytes_accessed = (b_pad * k_pad * 2                # x
                      + w1_traffic
                      + h_pad * n_pad * 2              # Wcat (fetched once)
                      + (h_pad + n_pad) * 4            # biases
                      + b_pad * n_pad * 4)             # output

    out = pl.pallas_call(
        kernel,
        out_shape=jax.ShapeDtypeStruct((b_pad, n_pad), jnp.float32),
        grid_spec=pltpu.PrefetchScalarGridSpec(
            num_scalar_prefetch=0,
            grid=grid,
            in_specs=in_specs,
            out_specs=out_spec,
            scratch_shapes=scratch,
        ),
        compiler_params=pltpu.CompilerParams(
            dimension_semantics=dims,
            vmem_limit_bytes=int(budget),
        ),
        cost_estimate=pl.CostEstimate(flops=flops, transcendentals=0,
                                      bytes_accessed=bytes_accessed),
    )(x, params["w1"], params["b1"], params["wcat"], params["bcat"])

    # Padded rows/lanes contain garbage by construction; slice them off here.
    mu = out[:batch, :latent]
    log_std = out[:batch, latent:2 * latent]
    return mu, log_std


# --------------------------------------------------------------------------- #
# demo / correctness check
# --------------------------------------------------------------------------- #
if __name__ == "__main__":
    key = jax.random.PRNGKey(0)

    def init_linear(k, fan_in, fan_out):
        kw, kb = jax.random.split(k)
        bound = 1.0 / jnp.sqrt(fan_in)
        w = jax.random.uniform(kw, (fan_in, fan_out), jnp.float32, -bound, bound)
        b = jax.random.uniform(kb, (fan_out,), jnp.float32, -bound, bound)
        return w, b

    def ref_forward(x, w1, b1, wmu, bmu, wls, bls):
        # Reference with the same bf16 operand rounding the MXU sees.
        bf = lambda a: a.astype(jnp.bfloat16).astype(jnp.float32)
        h = jnp.maximum(bf(x) @ bf(w1) + b1.reshape(1, -1), 0.0)
        return (bf(h) @ bf(wmu) + bmu.reshape(1, -1),
                bf(h) @ bf(wls) + bls.reshape(1, -1))

    # ---- Test 1: small demo shapes (resident-W1, single batch tile) --------
    batch, in_dim, hidden, latent = 8, 32, 32, 16
    k0, kx, k1, k2, k3 = jax.random.split(key, 5)
    x = jax.random.normal(kx, (batch, in_dim), jnp.float32)
    w1, b1 = init_linear(k1, in_dim, hidden)          # shared_layer (Linear+ReLU)
    wmu, bmu = init_linear(k2, hidden, latent)        # fc_mu
    wls, bls = init_linear(k3, hidden, latent)        # fc_logstd

    params = enc_prepare_params(w1, b1, wmu, bmu, wls, bls)
    mu, log_std = enc_forward(x, params)
    jax.block_until_ready((mu, log_std))

    mu_r, ls_r = ref_forward(x, w1, b1, wmu, bmu, wls, bls)
    assert mu.shape == (batch, latent) and log_std.shape == (batch, latent)
    assert jnp.allclose(mu, mu_r, atol=2e-2, rtol=2e-2), "mu mismatch"
    assert jnp.allclose(log_std, ls_r, atol=2e-2, rtol=2e-2), "log_std mismatch"

    # ---- Test 2: exercise the streamed-K (multi-step reduction) kernel -----
    batch2, in_dim2, hidden2, latent2 = 48, 384, 64, 16
    kx2, k12, k22, k32 = jax.random.split(k0, 4)
    x2 = jax.random.normal(kx2, (batch2, in_dim2), jnp.float32)
    w1b, b1b = init_linear(k12, in_dim2, hidden2)
    wmub, bmub = init_linear(k22, hidden2, latent2)
    wlsb, blsb = init_linear(k32, hidden2, latent2)

    params2 = enc_prepare_params(w1b, b1b, wmub, bmub, wlsb, blsb,
                                 tk_max=128, _force_stream=True)
    mu2, ls2 = enc_forward(x2, params2)
    jax.block_until_ready((mu2, ls2))

    mu2_r, ls2_r = ref_forward(x2, w1b, b1b, wmub, bmub, wlsb, blsb)
    assert jnp.allclose(mu2, mu2_r, atol=3e-2, rtol=3e-2), "stream mu mismatch"
    assert jnp.allclose(ls2, ls2_r, atol=3e-2, rtol=3e-2), "stream log_std mismatch"

    print("KERNEL_OK")
</pallas_src>

<mosaic_0001>
module attributes {stable_mosaic.version = 11 : i64} {
  func.func @enc_kernel_resident(%arg0: i32, %arg1: memref<8x128xbf16, #tpu.memory_space<vmem>>, %arg2: memref<128x128xbf16, #tpu.memory_space<vmem>>, %arg3: memref<1x128xf32, #tpu.memory_space<vmem>>, %arg4: memref<128x128xbf16, #tpu.memory_space<vmem>>, %arg5: memref<1x128xf32, #tpu.memory_space<vmem>>, %arg6: memref<8x128xf32, #tpu.memory_space<vmem>>) attributes {dimension_semantics = [#tpu.dimension_semantics<parallel>], iteration_bounds = array<i64: 1>, scalar_prefetch = 0 : i64, scratch_operands = 0 : i64, tpu.core_type = #tpu.core_type<tc>, window_params = [{transform_indices = @transform_0, window_bounds = array<i64: 8, 128>}, {pipeline_mode = #tpu.pipeline_mode<synchronous>, transform_indices = @transform_1, window_bounds = array<i64: 128, 128>}, {pipeline_mode = #tpu.pipeline_mode<synchronous>, transform_indices = @transform_2, window_bounds = array<i64: 1, 128>}, {pipeline_mode = #tpu.pipeline_mode<synchronous>, transform_indices = @transform_3, window_bounds = array<i64: 128, 128>}, {pipeline_mode = #tpu.pipeline_mode<synchronous>, transform_indices = @transform_4, window_bounds = array<i64: 1, 128>}, {transform_indices = @transform_5, window_bounds = array<i64: 8, 128>}]} {
    %c0 = arith.constant 0 : index
    %c0_0 = arith.constant 0 : index
    %0 = vector.load %arg1[%c0, %c0_0] : memref<8x128xbf16, #tpu.memory_space<vmem>>, vector<8x128xbf16>
    %c0_1 = arith.constant 0 : index
    %c0_2 = arith.constant 0 : index
    %1 = vector.load %arg2[%c0_1, %c0_2] : memref<128x128xbf16, #tpu.memory_space<vmem>>, vector<128x128xbf16>
    %cst = arith.constant dense<0.000000e+00> : vector<8x128xf32>
    %2 = tpu.matmul %0, %1, %cst {dimension_numbers = #tpu.dot_dimension_numbers<[1], [0], [0], [1], [0, 0, 1, 1], [], []>} : vector<8x128xbf16>, vector<128x128xbf16>, vector<8x128xf32> -> vector<8x128xf32>
    %c0_3 = arith.constant 0 : index
    %c0_4 = arith.constant 0 : index
    %3 = vector.load %arg3[%c0_3, %c0_4] : memref<1x128xf32, #tpu.memory_space<vmem>>, vector<1x128xf32>
    %4 = vector.broadcast %3 : vector<1x128xf32> to vector<8x128xf32>
    %5 = arith.addf %2, %4 : vector<8x128xf32>
    %cst_5 = arith.constant 0.000000e+00 : f32
    %6 = vector.broadcast %cst_5 : f32 to vector<8x128xf32>
    %7 = arith.maximumf %5, %6 : vector<8x128xf32>
    %8 = arith.truncf %7 : vector<8x128xf32> to vector<8x128xbf16>
    %c0_6 = arith.constant 0 : index
    %c0_7 = arith.constant 0 : index
    %9 = vector.load %arg4[%c0_6, %c0_7] : memref<128x128xbf16, #tpu.memory_space<vmem>>, vector<128x128xbf16>
    %cst_8 = arith.constant dense<0.000000e+00> : vector<8x128xf32>
    %10 = tpu.matmul %8, %9, %cst_8 {dimension_numbers = #tpu.dot_dimension_numbers<[1], [0], [0], [1], [0, 0, 1, 1], [], []>} : vector<8x128xbf16>, vector<128x128xbf16>, vector<8x128xf32> -> vector<8x128xf32>
    %c0_9 = arith.constant 0 : index
    %c0_10 = arith.constant 0 : index
    %11 = vector.load %arg5[%c0_9, %c0_10] : memref<1x128xf32, #tpu.memory_space<vmem>>, vector<1x128xf32>
    %12 = vector.broadcast %11 : vector<1x128xf32> to vector<8x128xf32>
    %13 = arith.addf %10, %12 : vector<8x128xf32>
    %c0_11 = arith.constant 0 : index
    %c0_12 = arith.constant 0 : index
    %14 = vector.load %arg6[%c0_11, %c0_12] : memref<8x128xf32, #tpu.memory_space<vmem>>, vector<8x128xf32>
    tpu.vector_store %arg6[%c0_11, %c0_12], %13 {strides = array<i32>} : memref<8x128xf32, #tpu.memory_space<vmem>>, vector<8x128xf32>,
    return
  }
  func.func @transform_0(%arg0: i32) -> (i32, i32) {
    %c0_i32 = arith.constant 0 : i32
    %c0_i32_0 = arith.constant 0 : i32
    return %arg0, %c0_i32 : i32, i32
  }
  func.func @transform_1(%arg0: i32) -> (i32, i32) {
    %c0_i32 = arith.constant 0 : i32
    %c0_i32_0 = arith.constant 0 : i32
    %c0_i32_1 = arith.constant 0 : i32
    return %c0_i32, %c0_i32_0 : i32, i32
  }
  func.func @transform_2(%arg0: i32) -> (i32, i32) {
    %c0_i32 = arith.constant 0 : i32
    %c0_i32_0 = arith.constant 0 : i32
    %c0_i32_1 = arith.constant 0 : i32
    return %c0_i32, %c0_i32_0 : i32, i32
  }
  func.func @transform_3(%arg0: i32) -> (i32, i32) {
    %c0_i32 = arith.constant 0 : i32
    %c0_i32_0 = arith.constant 0 : i32
    %c0_i32_1 = arith.constant 0 : i32
    return %c0_i32, %c0_i32_0 : i32, i32
  }
  func.func @transform_4(%arg0: i32) -> (i32, i32) {
    %c0_i32 = arith.constant 0 : i32
    %c0_i32_0 = arith.constant 0 : i32
    %c0_i32_1 = arith.constant 0 : i32
    return %c0_i32, %c0_i32_0 : i32, i32
  }
  func.func @transform_5(%arg0: i32) -> (i32, i32) {
    %c0_i32 = arith.constant 0 : i32
    %c0_i32_0 = arith.constant 0 : i32
    return %arg0, %c0_i32 : i32, i32
  }
}

</mosaic_0001>

<llo_original>
// kernel: tpu_custom_call.1
$region0: #{tpu_custom_call.1}
  #allocation0 [shape = 'u32[]', space=smem, size = 0x4, offset = 0x4, fixed_abs, tag = 'smem constant byte address 0x4 - core index']
  #allocation1 [shape = 'u32[144,128]{1,0:T(1,128)}', space=vmem, size = 0x12000, scoped, tag = 'internal scratch']
  %s0 = inlined_call_operand.hbm [shape: bf16[8,128], index: 0, kind: input, shape index: {}]
  %s1 = inlined_call_operand.hbm [shape: bf16[128,128], index: 1, kind: input, shape index: {}]
  %s2 = inlined_call_operand.vmem [shape: f32[1,128], index: 2, kind: input, shape index: {}]
  %s3 = inlined_call_operand.hbm [shape: bf16[128,128], index: 3, kind: input, shape index: {}]
  %s4 = inlined_call_operand.vmem [shape: f32[1,128], index: 4, kind: input, shape index: {}]
  %s5 = inlined_call_operand.hbm [shape: f32[8,128], index: 5, kind: output, shape index: {}]
  %s6 = sld [smem:[#allocation0]]
  $region42: #{tpu_custom_call.1} parent=0
    _
  %s8 = ssub.s32 1, %s6
  %s9 = scalar_select 0, %s8, %s6
  $region1: #{tpu_custom_call.1} parent=0
    #allocation2 [shape = 'u8[2048]{0}', space=vmem, size = 0x800, scoped, tag = 'input window, operand 0, single buffered']
    #allocation3 [shape = 's32[1]{0}', space=sflag, size = 0x4, scoped, tag = 'scoped memory for tpu_custom_call.1']
    #allocation4 [shape = 's32[1]{0}', space=sflag, size = 0x4, scoped, tag = 'scoped memory for tpu_custom_call.1']
    #allocation5 [shape = 'u8[32768]{0}', space=vmem, size = 0x8000, scoped, tag = 'input window, operand 1, single buffered']
    #allocation6 [shape = 's32[1]{0}', space=sflag, size = 0x4, scoped, tag = 'scoped memory for tpu_custom_call.1']
    #allocation7 [shape = 'u8[32768]{0}', space=vmem, size = 0x8000, scoped, tag = 'input window, operand 3, single buffered']
    #allocation8 [shape = 'u8[4096]{0}', space=vmem, size = 0x1000, scoped, tag = 'output window, operand 0, single buffered']
    %10 = vsyncpa [#allocation3], 0
    %11 = vsyncpa [#allocation6], 0
    %12 = vsyncpa [#allocation4], 0
    // Predicated region
    $region2: #{tpu_custom_call.1} parent=1 // pred_check
      _
    $region3: #{tpu_custom_call.1} parent=1 // pred_check_branch
      %14 = sbr.rel (0) target = $region5
    $region4: #{tpu_custom_call.1} parent=1 // pred_region
      %s16 = ssub.s32 64, 64
      %17 = vsyncadd [#allocation3], %s16
      %s19 = sshll.u32 [#allocation2], 4
      %s20 = int_to_ptr.vmem [resolvable:$true] %s19
      %22 = dma.hbm_to_vmem [thread:$0]  %s0, 64, %s20, [#allocation3]
    $region5: #{tpu_custom_call.1} parent=1 // pred_fallthru
      _
    // Predicated region
    $region6: #{tpu_custom_call.1} parent=1 // pred_check
      _
    $region7: #{tpu_custom_call.1} parent=1 // pred_check_branch
      %24 = sbr.rel (0) target = $region9
    $region8: #{tpu_custom_call.1} parent=1 // pred_region
      %s26 = ssub.s32 1024, 1024
      %27 = vsyncadd [#allocation6], %s26
      %s28 = sshll.u32 [#allocation5], 4
      %s29 = int_to_ptr.vmem [resolvable:$true] %s28
      %34 = dma.hbm_to_vmem [thread:$0]  %s1, 1024, %s29, [#allocation6], 64, 64, 4
    $region9: #{tpu_custom_call.1} parent=1 // pred_fallthru
      _
    // Predicated region
    $region10: #{tpu_custom_call.1} parent=1 // pred_check
      _
    $region11: #{tpu_custom_call.1} parent=1 // pred_check_branch
      %36 = sbr.rel (0) target = $region13
    $region12: #{tpu_custom_call.1} parent=1 // pred_region
      _
    $region13: #{tpu_custom_call.1} parent=1 // pred_fallthru
      _
    // Predicated region
    $region14: #{tpu_custom_call.1} parent=1 // pred_check
      _
    $region15: #{tpu_custom_call.1} parent=1 // pred_check_branch
      %38 = sbr.rel (0) target = $region17
    $region16: #{tpu_custom_call.1} parent=1 // pred_region
      %s40 = ssub.s32 1024, 1024
      %41 = vsyncadd [#allocation6], %s40
      %s42 = sshll.u32 [#allocation7], 4
      %s43 = int_to_ptr.vmem [resolvable:$true] %s42
      %48 = dma.hbm_to_vmem [thread:$0]  %s3, 1024, %s43, [#allocation6], 64, 64, 4
    $region17: #{tpu_custom_call.1} parent=1 // pred_fallthru
      _
    // Predicated region
    $region18: #{tpu_custom_call.1} parent=1 // pred_check
      _
    $region19: #{tpu_custom_call.1} parent=1 // pred_check_branch
      %50 = sbr.rel (0) target = $region21
    $region20: #{tpu_custom_call.1} parent=1 // pred_region
      _
    $region21: #{tpu_custom_call.1} parent=1 // pred_fallthru
      _
    // Predicated region
    $region22: #{tpu_custom_call.1} parent=1 // pred_check
      _
    $region23: #{tpu_custom_call.1} parent=1 // pred_check_branch
      %52 = sbr.rel (0) target = $region25
    $region24: #{tpu_custom_call.1} parent=1 // pred_region
      %53 = dma.done [#allocation3], 64
    $region25: #{tpu_custom_call.1} parent=1 // pred_fallthru
      _
    // Predicated region
    $region26: #{tpu_custom_call.1} parent=1 // pred_check
      _
    $region27: #{tpu_custom_call.1} parent=1 // pred_check_branch
      %55 = sbr.rel (0) target = $region29
    $region28: #{tpu_custom_call.1} parent=1 // pred_region
      %56 = dma.done [#allocation6], 1024
    $region29: #{tpu_custom_call.1} parent=1 // pred_fallthru
      _
    // Predicated region
    $region30: #{tpu_custom_call.1} parent=1 // pred_check
      _
    $region31: #{tpu_custom_call.1} parent=1 // pred_check_branch
      %58 = sbr.rel (0) target = $region33
    $region32: #{tpu_custom_call.1} parent=1 // pred_region
      %59 = dma.done [#allocation6], 1024
    $region33: #{tpu_custom_call.1} parent=1 // pred_fallthru
      _
    %v61 = vld [vmem:[#allocation2] sm:$0xf]
    %v62 = vld [vmem:[#allocation5] sm:$0xf]
    %v63 = vld [vmem:[#allocation5 + $0x4] sm:$0xf]
    %v64 = vld [vmem:[#allocation5 + $0x8] sm:$0xf]
    %v65 = vld [vmem:[#allocation5 + $0xc] sm:$0xf]
    %v66 = vld [vmem:[#allocation5 + $0x10] sm:$0xf]
    %v67 = vld [vmem:[#allocation5 + $0x14] sm:$0xf]
    %v68 = vld [vmem:[#allocation5 + $0x18] sm:$0xf]
    %v69 = vld [vmem:[#allocation5 + $0x1c] sm:$0xf]
    %v70 = vld [vmem:[#allocation5 + $0x20] sm:$0xf]
    %v71 = vld [vmem:[#allocation5 + $0x24] sm:$0xf]
    %v72 = vld [vmem:[#allocation5 + $0x28] sm:$0xf]
    %v73 = vld [vmem:[#allocation5 + $0x2c] sm:$0xf]
    %v74 = vld [vmem:[#allocation5 + $0x30] sm:$0xf]
    %v75 = vld [vmem:[#allocation5 + $0x34] sm:$0xf]
    %v76 = vld [vmem:[#allocation5 + $0x38] sm:$0xf]
    %v77 = vld [vmem:[#allocation5 + $0x3c] sm:$0xf]
    %v78 = vld [vmem:[%s2] sm:$0x1]
    %v80 = vlaneseq
    %v81 = vshrl.u32 %v80, 7
    %v82 = vsub.s32 0, %v81
    %v83 = vrot.slane %v78, %v82
    %v101 = vunpack.c.l.b16 %v62
    %v102 = vunpack.c.l.b16 %v63
    %v103 = vunpack.c.l.b16 %v64
    %v104 = vunpack.c.l.b16 %v65
    %v105 = vunpack.c.l.b16 %v66
    %v106 = vunpack.c.l.b16 %v67
    %v107 = vunpack.c.l.b16 %v68
    %v108 = vunpack.c.l.b16 %v69
    %v109 = vunpack.c.l.b16 %v70
    %v110 = vunpack.c.l.b16 %v71
    %v111 = vunpack.c.l.b16 %v72
    %v112 = vunpack.c.l.b16 %v73
    %v113 = vunpack.c.l.b16 %v74
    %v114 = vunpack.c.l.b16 %v75
    %v115 = vunpack.c.l.b16 %v76
    %v116 = vunpack.c.l.b16 %v77
    %v117 = vpack.c.b16 %v102, %v101
    %v118 = vpack.c.b16 %v104, %v103
    %v119 = vpack.c.b16 %v106, %v105
    %v120 = vpack.c.b16 %v108, %v107
    %v121 = vpack.c.b16 %v110, %v109
    %v122 = vpack.c.b16 %v112, %v111
    %v123 = vpack.c.b16 %v114, %v113
    %v124 = vpack.c.b16 %v116, %v115
    %133 = vmatprep.subr.bf16.mxu0 0
    %134 = vmatpush1.bf16.msra.mxu0 %v117
    %135 = vmatprep.subr.bf16.mxu0 0
    %136 = vmatpush1.bf16.msra.mxu0 %v118
    %137 = vmatprep.subr.bf16.mxu0 0
    %138 = vmatpush1.bf16.msra.mxu0 %v119
    %139 = vmatprep.subr.bf16.mxu0 0
    %140 = vmatpush1.bf16.msra.mxu0 %v120
    %141 = vmatprep.subr.bf16.mxu0 0
    %142 = vmatpush1.bf16.msra.mxu0 %v121
    %143 = vmatprep.subr.bf16.mxu0 0
    %144 = vmatpush1.bf16.msra.mxu0 %v122
    %145 = vmatprep.subr.bf16.mxu0 0
    %146 = vmatpush1.bf16.msra.mxu0 %v123
    %147 = vmatprep.subr.bf16.mxu0 0
    %148 = vmatpush1.bf16.msra.mxu0 %v124
    %149 = vmatprep.subr.bf16.mxu0 0
    %150 = vmatpush1.bf16.msra.mxu0 0
    %151 = vmatprep.subr.bf16.mxu0 0
    %152 = vmatpush1.bf16.msra.mxu0 0
    %153 = vmatprep.subr.bf16.mxu0 0
    %154 = vmatpush1.bf16.msra.mxu0 0
    %155 = vmatprep.subr.bf16.mxu0 0
    %156 = vmatpush1.bf16.msra.mxu0 0
    %157 = vmatprep.subr.bf16.mxu0 0
    %158 = vmatpush1.bf16.msra.mxu0 0
    %159 = vmatprep.subr.bf16.mxu0 0
    %160 = vmatpush1.bf16.msra.mxu0 0
    %161 = vmatprep.subr.bf16.mxu0 0
    %162 = vmatpush1.bf16.msra.mxu0 0
    %163 = vmatprep.subr.bf16.mxu0 0
    %164 = vmatpush1.bf16.msra.mxu0 0
    %165 = vmatprep.mubr.bf16.mxu0 0
    %166 = vmatmul.mubr.bf16.gmra.mrb[0].mxu0 %v61
    %v167 = vpop.f32.mrb[0].mxu0
    %v168 = vadd.f32 %v83, %v167
    %v169 = vpop.f32.mrb[0].mxu0
    %v170 = vpop.f32.mrb[0].mxu0
    %v171 = vpop.f32.mrb[0].mxu0
    %172 = vdwg.mxu0
    %v173 = vmax.f32 %v168, 0.0
    %v174 = vpack.c.bf16 %v173, %v173
    %v175 = vld [vmem:[#allocation7] sm:$0xf]
    %v176 = vld [vmem:[#allocation7 + $0x4] sm:$0xf]
    %v177 = vld [vmem:[#allocation7 + $0x8] sm:$0xf]
    %v178 = vld [vmem:[#allocation7 + $0xc] sm:$0xf]
    %v179 = vld [vmem:[#allocation7 + $0x10] sm:$0xf]
    %v180 = vld [vmem:[#allocation7 + $0x14] sm:$0xf]
    %v181 = vld [vmem:[#allocation7 + $0x18] sm:$0xf]
    %v182 = vld [vmem:[#allocation7 + $0x1c] sm:$0xf]
    %v183 = vld [vmem:[#allocation7 + $0x20] sm:$0xf]
    %v184 = vld [vmem:[#allocation7 + $0x24] sm:$0xf]
    %v185 = vld [vmem:[#allocation7 + $0x28] sm:$0xf]
    %v186 = vld [vmem:[#allocation7 + $0x2c] sm:$0xf]
    %v187 = vld [vmem:[#allocation7 + $0x30] sm:$0xf]
    %v188 = vld [vmem:[#allocation7 + $0x34] sm:$0xf]
    %v189 = vld [vmem:[#allocation7 + $0x38] sm:$0xf]
    %v190 = vld [vmem:[#allocation7 + $0x3c] sm:$0xf]
    %v191 = vld [vmem:[%s4] sm:$0x1]
    %v193 = vlaneseq
    %v194 = vshrl.u32 %v193, 7
    %v195 = vsub.s32 0, %v194
    %v196 = vrot.slane %v191, %v195
    %v214 = vunpack.c.l.b16 %v175
    %v215 = vunpack.c.l.b16 %v176
    %v216 = vunpack.c.l.b16 %v177
    %v217 = vunpack.c.l.b16 %v178
    %v218 = vunpack.c.l.b16 %v179
    %v219 = vunpack.c.l.b16 %v180
    %v220 = vunpack.c.l.b16 %v181
    %v221 = vunpack.c.l.b16 %v182
    %v222 = vunpack.c.l.b16 %v183
    %v223 = vunpack.c.l.b16 %v184
    %v224 = vunpack.c.l.b16 %v185
    %v225 = vunpack.c.l.b16 %v186
    %v226 = vunpack.c.l.b16 %v187
    %v227 = vunpack.c.l.b16 %v188
    %v228 = vunpack.c.l.b16 %v189
    %v229 = vunpack.c.l.b16 %v190
    %v230 = vpack.c.b16 %v215, %v214
    %v231 = vpack.c.b16 %v217, %v216
    %v232 = vpack.c.b16 %v219, %v218
    %v233 = vpack.c.b16 %v221, %v220
    %v234 = vpack.c.b16 %v223, %v222
    %v235 = vpack.c.b16 %v225, %v224
    %v236 = vpack.c.b16 %v227, %v226
    %v237 = vpack.c.b16 %v229, %v228
    %246 = vmatprep.subr.bf16.mxu0 0
    %247 = vmatpush1.bf16.msra.mxu0 %v230
    %248 = vmatprep.subr.bf16.mxu0 0
    %249 = vmatpush1.bf16.msra.mxu0 %v231
    %250 = vmatprep.subr.bf16.mxu0 0
    %251 = vmatpush1.bf16.msra.mxu0 %v232
    %252 = vmatprep.subr.bf16.mxu0 0
    %253 = vmatpush1.bf16.msra.mxu0 %v233
    %254 = vmatprep.subr.bf16.mxu0 0
    %255 = vmatpush1.bf16.msra.mxu0 %v234
    %256 = vmatprep.subr.bf16.mxu0 0
    %257 = vmatpush1.bf16.msra.mxu0 %v235
    %258 = vmatprep.subr.bf16.mxu0 0
    %259 = vmatpush1.bf16.msra.mxu0 %v236
    %260 = vmatprep.subr.bf16.mxu0 0
    %261 = vmatpush1.bf16.msra.mxu0 %v237
    %262 = vmatprep.subr.bf16.mxu0 0
    %263 = vmatpush1.bf16.msra.mxu0 0
    %264 = vmatprep.subr.bf16.mxu0 0
    %265 = vmatpush1.bf16.msra.mxu0 0
    %266 = vmatprep.subr.bf16.mxu0 0
    %267 = vmatpush1.bf16.msra.mxu0 0
    %268 = vmatprep.subr.bf16.mxu0 0
    %269 = vmatpush1.bf16.msra.mxu0 0
    %270 = vmatprep.subr.bf16.mxu0 0
    %271 = vmatpush1.bf16.msra.mxu0 0
    %272 = vmatprep.subr.bf16.mxu0 0
    %273 = vmatpush1.bf16.msra.mxu0 0
    %274 = vmatprep.subr.bf16.mxu0 0
    %275 = vmatpush1.bf16.msra.mxu0 0
    %276 = vmatprep.subr.bf16.mxu0 0
    %277 = vmatpush1.bf16.msra.mxu0 0
    %278 = vmatprep.mubr.bf16.mxu0 0
    %279 = vmatmul.mubr.bf16.gmra.mrb[0].mxu0 %v174
    %v280 = vpop.f32.mrb[0].mxu0
    %v281 = vadd.f32 %v196, %v280
    %v282 = vpop.f32.mrb[0].mxu0
    %v283 = vpop.f32.mrb[0].mxu0
    %v284 = vpop.f32.mrb[0].mxu0
    %285 = vdwg.mxu0
    %286 = vst [vmem:[#allocation8] sm:$0xff] %v281
    // Predicated region
    $region34: #{tpu_custom_call.1} parent=1 // pred_check
      _
    $region35: #{tpu_custom_call.1} parent=1 // pred_check_branch
      %288 = sbr.rel (0) target = $region37
    $region36: #{tpu_custom_call.1} parent=1 // pred_region
      %s290 = ssub.s32 128, 128
      %291 = vsyncadd [#allocation4], %s290
      %s293 = sshll.u32 [#allocation8], 4
      %s294 = int_to_ptr.vmem [resolvable:$true] %s293
      %296 = dma.vmem_to_hbm [thread:$0]  %s294, 128, %s5, [#allocation4]
    $region37: #{tpu_custom_call.1} parent=1 // pred_fallthru
      _
    // Predicated region
    $region38: #{tpu_custom_call.1} parent=1 // pred_check
      _
    $region39: #{tpu_custom_call.1} parent=1 // pred_check_branch
      %298 = sbr.rel (0) target = $region41
    $region40: #{tpu_custom_call.1} parent=1 // pred_region
      %299 = dma.done [#allocation4], 128
    $region41: #{tpu_custom_call.1} parent=1 // pred_fallthru
      _
    %300 = vsyncpa [#allocation3], 1
    %301 = vsyncpa [#allocation6], 1
    %302 = vsyncpa [#allocation4], 1

</llo_original>
